<compile_context>
chip_gen: v5e
topology: v5e:2x2
jax: 0.10.0
libtpu: 0.0.40
codegen_flags: <defaults>
</compile_context>

<pallas_src>
import jax
import jax.numpy as jnp
from jax.experimental import pallas as pl
from jax.experimental.pallas import tpu as pltpu

F32 = jnp.float32


def _round_up(x, m):
    return (x + m - 1) // m * m


def _pick_lane_tile(C, HW):
    """Lane tile (multiple of 128) with block bytes roughly <= 1 MiB."""
    hw_units = max(1, _round_up(HW, 128) // 128)
    budget_units = max(1, (1 << 20) // (max(C, 1) * 128 * 4))
    k = min(hw_units, budget_units, 16)                      # cap at 2048 lanes
    return 128 * k


# ----------------------------------------------------------------- pass 1: global avg pool
def _pool_kernel(x_ref, o_ref):
    # x_ref: (1, C, Lt) activation tile; o_ref: (1, C, 1) per-(sample,channel) accumulator
    @pl.when(pl.program_id(1) == 0)
    def _():
        o_ref[...] = jnp.zeros_like(o_ref)

    o_ref[...] += jnp.sum(x_ref[...], axis=2, keepdims=True)


# ---------------------------------------------------- pass 2: squeeze FCs + ReLU + sigmoid
def _se_fc_kernel(m_ref, w1_ref, b1_ref, w2_ref, b2_ref, o_ref):
    # m_ref: (Np, Cp) batched channel means; two tiny MXU matmuls (f32 accumulate).
    h = jnp.dot(m_ref[...], w1_ref[...], preferred_element_type=jnp.float32) + b1_ref[...]
    h = jnp.maximum(h, 0.0)                                        # ReLU
    s = jnp.dot(h, w2_ref[...], preferred_element_type=jnp.float32) + b2_ref[...]
    o_ref[...] = jax.nn.sigmoid(s)


# ------------------------------------------------------------- pass 3: channel-wise rescale
def _scale_kernel(x_ref, s_ref, o_ref):
    # x_ref: (1, C, Lt); s_ref: (1, C, 1) per-(sample,channel) scale, lane-broadcast
    o_ref[...] = (x_ref[...] * s_ref[...]).astype(o_ref.dtype)


# -------------------------------------------------------------------------------- wrapper
def squeeze_excitation(x_nchw, w1, b1, w2, b2):
    """SqueezeExcitation forward.

    x_nchw: (N, C, H, W)
    w1: (mid, C, 1, 1), b1: (mid,)   -- 1x1 conv C -> mid
    w2: (C, mid, 1, 1), b2: (C,)     -- 1x1 conv mid -> C
    """
    N, C, H, W = x_nchw.shape
    HW = H * W
    mid = w1.shape[0]
    out_dtype = x_nchw.dtype

    # Native NCHW layout, flattened spatial dims on the lane axis (pure metadata reshape).
    x3 = x_nchw.astype(F32).reshape(N, C, HW)

    Lt = _pick_lane_tile(C, HW)
    HWp = _round_up(HW, Lt)
    if HWp != HW:
        x3 = jnp.pad(x3, ((0, 0), (0, 0), (0, HWp - HW)))          # zero cols: exact for sum

    # ---- pass 1: per-(sample, channel) sums; accumulator resident across lane tiles.
    sums = pl.pallas_call(
        _pool_kernel,
        out_shape=jax.ShapeDtypeStruct((N, C, 1), F32),
        grid_spec=pltpu.PrefetchScalarGridSpec(
            num_scalar_prefetch=0,
            grid=(N, HWp // Lt),
            in_specs=[pl.BlockSpec((1, C, Lt), lambda n, t: (n, 0, t))],
            out_specs=pl.BlockSpec((1, C, 1), lambda n, t: (n, 0, 0)),
        ),
        compiler_params=pltpu.CompilerParams(
            dimension_semantics=("parallel", "arbitrary")),
    )(x3)

    mean = sums[:, :, 0] / jnp.float32(HW)                         # (N, C), tiny

    # ---- pass 2: batched squeeze FCs on (8,128)-zero-padded operands.
    # Zero padding is exact: padded hidden units stay 0 through ReLU and hit zero rows of
    # w2; padded batch rows / channels are sliced off afterwards.
    Np, Cp, Mp = _round_up(N, 8), _round_up(C, 128), _round_up(mid, 128)
    mean_p = jnp.zeros((Np, Cp), F32).at[:N, :C].set(mean)
    w1_p = jnp.zeros((Cp, Mp), F32).at[:C, :mid].set(w1.reshape(mid, C).astype(F32).T)
    b1_p = jnp.zeros((1, Mp), F32).at[0, :mid].set(b1.astype(F32))
    w2_p = jnp.zeros((Mp, Cp), F32).at[:mid, :C].set(w2.reshape(C, mid).astype(F32).T)
    b2_p = jnp.zeros((1, Cp), F32).at[0, :C].set(b2.astype(F32))

    scale_p = pl.pallas_call(
        _se_fc_kernel,
        out_shape=jax.ShapeDtypeStruct((Np, Cp), F32),
    )(mean_p, w1_p, b1_p, w2_p, b2_p)
    scale = scale_p[:N, :C].reshape(N, C, 1)                       # (N, C, 1)

    # ---- pass 3: x * scale, lane-dense blocks, scale lane-broadcast inside the kernel.
    out3 = pl.pallas_call(
        _scale_kernel,
        out_shape=jax.ShapeDtypeStruct((N, C, HWp), out_dtype),
        grid_spec=pltpu.PrefetchScalarGridSpec(
            num_scalar_prefetch=0,
            grid=(N, HWp // Lt),
            in_specs=[pl.BlockSpec((1, C, Lt), lambda n, t: (n, 0, t)),
                      pl.BlockSpec((1, C, 1), lambda n, t: (n, 0, 0))],
            out_specs=pl.BlockSpec((1, C, Lt), lambda n, t: (n, 0, t)),
        ),
        compiler_params=pltpu.CompilerParams(
            dimension_semantics=("parallel", "parallel")),
    )(x3, scale)

    return out3[:, :, :HW].reshape(N, C, H, W)


# ------------------------------------------------------------------------ pure-JAX reference
def se_reference(x, w1, b1, w2, b2):
    m = jnp.mean(x, axis=(2, 3))                                   # (N, C)
    h = jnp.einsum("nc,mc->nm", m, w1.reshape(w1.shape[0], -1)) + b1
    h = jnp.maximum(h, 0.0)
    s = jnp.einsum("nm,cm->nc", h, w2.reshape(w2.shape[0], -1)) + b2
    s = jax.nn.sigmoid(s)
    return x * s[:, :, None, None]


if __name__ == "__main__":
    key = jax.random.PRNGKey(0)
    kx, k1, k2, k3, k4 = jax.random.split(key, 5)

    N, C, H, W = 2, 32, 16, 16
    # Matches SqueezeExcitation.__init__: reduction = 16 (since C >= 16), mid = C // 16.
    reduction = 16 if C >= 16 else C
    mid = max(C // reduction, 1)

    x = jax.random.normal(kx, (N, C, H, W), F32)
    w1 = 0.1 * jax.random.normal(k1, (mid, C, 1, 1), F32)
    b1 = 0.1 * jax.random.normal(k2, (mid,), F32)
    w2 = 0.1 * jax.random.normal(k3, (C, mid, 1, 1), F32)
    b2 = 0.1 * jax.random.normal(k4, (C,), F32)

    fwd = jax.jit(squeeze_excitation)
    y = jax.block_until_ready(fwd(x, w1, b1, w2, b2))

    y_ref = se_reference(x, w1, b1, w2, b2)
    assert y.shape == x.shape, y.shape
    assert bool(jnp.all(jnp.isfinite(y)))
    assert bool(jnp.allclose(y, y_ref, rtol=1e-4, atol=1e-5)), \
        float(jnp.max(jnp.abs(y - y_ref)))
    print("KERNEL_OK")
</pallas_src>

<mosaic_0001>
module attributes {stable_mosaic.version = 11 : i64} {
  func.func @_pool_kernel(%arg0: i32, %arg1: i32, %arg2: memref<1x32x256xf32, #tpu.memory_space<vmem>>, %arg3: memref<1x32x1xf32, #tpu.memory_space<vmem>>) attributes {dimension_semantics = [#tpu.dimension_semantics<parallel>, #tpu.dimension_semantics<arbitrary>], iteration_bounds = array<i64: 2, 1>, scalar_prefetch = 0 : i64, scratch_operands = 0 : i64, tpu.core_type = #tpu.core_type<tc>, window_params = [{transform_indices = @transform_0, window_bounds = array<i64: 1, 32, 256>}, {transform_indices = @transform_1, window_bounds = array<i64: 1, 32, 1>}]} {
    %c0_i32 = arith.constant 0 : i32
    %0 = arith.cmpi eq, %arg1, %c0_i32 : i32
    %1 = arith.extui %0 : i1 to i32
    %c0_i32_0 = arith.constant 0 : i32
    %2 = arith.cmpi ne, %1, %c0_i32_0 : i32
    scf.if %2 {
      %cst_9 = arith.constant 0.000000e+00 : f32
      %9 = vector.broadcast %cst_9 : f32 to vector<1x32x1xf32>
      %c0_10 = arith.constant 0 : index
      %c0_11 = arith.constant 0 : index
      %c0_12 = arith.constant 0 : index
      %10 = vector.load %arg3[%c0_10, %c0_11, %c0_12] : memref<1x32x1xf32, #tpu.memory_space<vmem>>, vector<1x32x1xf32>
      tpu.vector_store %arg3[%c0_10, %c0_11, %c0_12], %9 {strides = array<i32>} : memref<1x32x1xf32, #tpu.memory_space<vmem>>, vector<1x32x1xf32>,
    } else {
    }
    %c0 = arith.constant 0 : index
    %c0_1 = arith.constant 0 : index
    %c0_2 = arith.constant 0 : index
    %3 = vector.load %arg3[%c0, %c0_1, %c0_2] : memref<1x32x1xf32, #tpu.memory_space<vmem>>, vector<1x32x1xf32>
    %c0_3 = arith.constant 0 : index
    %c0_4 = arith.constant 0 : index
    %c0_5 = arith.constant 0 : index
    %4 = vector.load %arg2[%c0_3, %c0_4, %c0_5] : memref<1x32x256xf32, #tpu.memory_space<vmem>>, vector<1x32x256xf32>
    %cst = arith.constant dense<0.000000e+00> : vector<1x32xf32>
    %5 = vector.multi_reduction <add>, %4, %cst [2] : vector<1x32x256xf32> to vector<1x32xf32>
    %6 = vector.shape_cast %5 : vector<1x32xf32> to vector<1x32x1xf32>
    %7 = arith.addf %3, %6 : vector<1x32x1xf32>
    %c0_6 = arith.constant 0 : index
    %c0_7 = arith.constant 0 : index
    %c0_8 = arith.constant 0 : index
    %8 = vector.load %arg3[%c0_6, %c0_7, %c0_8] : memref<1x32x1xf32, #tpu.memory_space<vmem>>, vector<1x32x1xf32>
    tpu.vector_store %arg3[%c0_6, %c0_7, %c0_8], %7 {strides = array<i32>} : memref<1x32x1xf32, #tpu.memory_space<vmem>>, vector<1x32x1xf32>,
    return
  }
  func.func @transform_0(%arg0: i32, %arg1: i32) -> (i32, i32, i32) {
    %c0_i32 = arith.constant 0 : i32
    %c0_i32_0 = arith.constant 0 : i32
    return %arg0, %c0_i32, %arg1 : i32, i32, i32
  }
  func.func @transform_1(%arg0: i32, %arg1: i32) -> (i32, i32, i32) {
    %c0_i32 = arith.constant 0 : i32
    %c0_i32_0 = arith.constant 0 : i32
    %c0_i32_1 = arith.constant 0 : i32
    return %arg0, %c0_i32, %c0_i32_0 : i32, i32, i32
  }
}

module attributes {stable_mosaic.version = 11 : i64} {
  func.func @_se_fc_kernel(%arg0: memref<8x128xf32, #tpu.memory_space<vmem>>, %arg1: memref<128x128xf32, #tpu.memory_space<vmem>>, %arg2: memref<1x128xf32, #tpu.memory_space<vmem>>, %arg3: memref<128x128xf32, #tpu.memory_space<vmem>>, %arg4: memref<1x128xf32, #tpu.memory_space<vmem>>, %arg5: memref<8x128xf32, #tpu.memory_space<vmem>>) attributes {dimension_semantics = [], scalar_prefetch = 0 : i64, scratch_operands = 0 : i64, tpu.core_type = #tpu.core_type<tc>} {
    %c0 = arith.constant 0 : index
    %c0_0 = arith.constant 0 : index
    %0 = vector.load %arg0[%c0, %c0_0] : memref<8x128xf32, #tpu.memory_space<vmem>>, vector<8x128xf32>
    %c0_1 = arith.constant 0 : index
    %c0_2 = arith.constant 0 : index
    %1 = vector.load %arg1[%c0_1, %c0_2] : memref<128x128xf32, #tpu.memory_space<vmem>>, vector<128x128xf32>
    %cst = arith.constant dense<0.000000e+00> : vector<8x128xf32>
    %2 = tpu.matmul %0, %1, %cst {dimension_numbers = #tpu.dot_dimension_numbers<[1], [0], [0], [1], [0, 0, 1, 1], [], []>} : vector<8x128xf32>, vector<128x128xf32>, vector<8x128xf32> -> vector<8x128xf32>
    %c0_3 = arith.constant 0 : index
    %c0_4 = arith.constant 0 : index
    %3 = vector.load %arg2[%c0_3, %c0_4] : memref<1x128xf32, #tpu.memory_space<vmem>>, vector<1x128xf32>
    %4 = vector.broadcast %3 : vector<1x128xf32> to vector<8x128xf32>
    %5 = arith.addf %2, %4 : vector<8x128xf32>
    %cst_5 = arith.constant 0.000000e+00 : f32
    %6 = vector.broadcast %cst_5 : f32 to vector<8x128xf32>
    %7 = arith.maximumf %5, %6 : vector<8x128xf32>
    %c0_6 = arith.constant 0 : index
    %c0_7 = arith.constant 0 : index
    %8 = vector.load %arg3[%c0_6, %c0_7] : memref<128x128xf32, #tpu.memory_space<vmem>>, vector<128x128xf32>
    %cst_8 = arith.constant dense<0.000000e+00> : vector<8x128xf32>
    %9 = tpu.matmul %7, %8, %cst_8 {dimension_numbers = #tpu.dot_dimension_numbers<[1], [0], [0], [1], [0, 0, 1, 1], [], []>} : vector<8x128xf32>, vector<128x128xf32>, vector<8x128xf32> -> vector<8x128xf32>
    %c0_9 = arith.constant 0 : index
    %c0_10 = arith.constant 0 : index
    %10 = vector.load %arg4[%c0_9, %c0_10] : memref<1x128xf32, #tpu.memory_space<vmem>>, vector<1x128xf32>
    %11 = vector.broadcast %10 : vector<1x128xf32> to vector<8x128xf32>
    %12 = arith.addf %9, %11 : vector<8x128xf32>
    %13 = arith.negf %12 : vector<8x128xf32>
    %14 = math.exp %13 : vector<8x128xf32>
    %cst_11 = arith.constant 1.000000e+00 : f32
    %15 = vector.broadcast %cst_11 : f32 to vector<8x128xf32>
    %16 = arith.addf %15, %14 : vector<8x128xf32>
    %17 = arith.divf %15, %16 : vector<8x128xf32>
    %c0_12 = arith.constant 0 : index
    %c0_13 = arith.constant 0 : index
    %18 = vector.load %arg5[%c0_12, %c0_13] : memref<8x128xf32, #tpu.memory_space<vmem>>, vector<8x128xf32>
    tpu.vector_store %arg5[%c0_12, %c0_13], %17 {strides = array<i32>} : memref<8x128xf32, #tpu.memory_space<vmem>>, vector<8x128xf32>,
    return
  }
}

module attributes {stable_mosaic.version = 11 : i64} {
  func.func @_scale_kernel(%arg0: i32, %arg1: i32, %arg2: memref<1x32x256xf32, #tpu.memory_space<vmem>>, %arg3: memref<1x32x1xf32, #tpu.memory_space<vmem>>, %arg4: memref<1x32x256xf32, #tpu.memory_space<vmem>>) attributes {dimension_semantics = [#tpu.dimension_semantics<parallel>, #tpu.dimension_semantics<parallel>], iteration_bounds = array<i64: 2, 1>, scalar_prefetch = 0 : i64, scratch_operands = 0 : i64, tpu.core_type = #tpu.core_type<tc>, window_params = [{transform_indices = @transform_0, window_bounds = array<i64: 1, 32, 256>}, {transform_indices = @transform_1, window_bounds = array<i64: 1, 32, 1>}, {transform_indices = @transform_2, window_bounds = array<i64: 1, 32, 256>}]} {
    %c0 = arith.constant 0 : index
    %c0_0 = arith.constant 0 : index
    %c0_1 = arith.constant 0 : index
    %0 = vector.load %arg2[%c0, %c0_0, %c0_1] : memref<1x32x256xf32, #tpu.memory_space<vmem>>, vector<1x32x256xf32>
    %c0_2 = arith.constant 0 : index
    %c0_3 = arith.constant 0 : index
    %c0_4 = arith.constant 0 : index
    %1 = vector.load %arg3[%c0_2, %c0_3, %c0_4] : memref<1x32x1xf32, #tpu.memory_space<vmem>>, vector<1x32x1xf32>
    %2 = vector.broadcast %1 : vector<1x32x1xf32> to vector<1x32x256xf32>
    %3 = arith.mulf %0, %2 : vector<1x32x256xf32>
    %c0_5 = arith.constant 0 : index
    %c0_6 = arith.constant 0 : index
    %c0_7 = arith.constant 0 : index
    %4 = vector.load %arg4[%c0_5, %c0_6, %c0_7] : memref<1x32x256xf32, #tpu.memory_space<vmem>>, vector<1x32x256xf32>
    tpu.vector_store %arg4[%c0_5, %c0_6, %c0_7], %3 {strides = array<i32>} : memref<1x32x256xf32, #tpu.memory_space<vmem>>, vector<1x32x256xf32>,
    return
  }
  func.func @transform_0(%arg0: i32, %arg1: i32) -> (i32, i32, i32) {
    %c0_i32 = arith.constant 0 : i32
    %c0_i32_0 = arith.constant 0 : i32
    return %arg0, %c0_i32, %arg1 : i32, i32, i32
  }
  func.func @transform_1(%arg0: i32, %arg1: i32) -> (i32, i32, i32) {
    %c0_i32 = arith.constant 0 : i32
    %c0_i32_0 = arith.constant 0 : i32
    %c0_i32_1 = arith.constant 0 : i32
    return %arg0, %c0_i32, %c0_i32_0 : i32, i32, i32
  }
  func.func @transform_2(%arg0: i32, %arg1: i32) -> (i32, i32, i32) {
    %c0_i32 = arith.constant 0 : i32
    %c0_i32_0 = arith.constant 0 : i32
    return %arg0, %c0_i32, %arg1 : i32, i32, i32
  }
}

</mosaic_0001>

<llo_original>
// kernel: squeeze_excitation.3
$region0: #{squeeze_excitation.3}
  #allocation0 [shape = 'u32[]', space=smem, size = 0x4, offset = 0x4, fixed_abs, tag = 'smem constant byte address 0x4 - core index']
  #allocation1 [shape = 'u32[72,128]{1,0:T(1,128)}', space=vmem, size = 0x9000, scoped, tag = 'internal scratch']
  %s0 = inlined_call_operand.vmem [shape: f32[2,32,256], index: 0, kind: input, shape index: {}]
  %s1 = inlined_call_operand.vmem [shape: f32[2,32,1], index: 1, kind: output, shape index: {}]
  %s2 = sld [smem:[#allocation0]]
  $region41: #{squeeze_excitation.3} parent=0
    _
  %s4 = ssub.s32 1, %s2
  %s5 = scalar_select 0, %s4, %s2
  loop: start=0, step=1, limit=4
  $region2: #{squeeze_excitation.3} parent=0 // loop_pre_header
    _
  $region3: #{squeeze_excitation.3} parent=0 // loop_header
    %s7 = sphi 0, %s11
    %p8 = scmp.ge.s32.totalorder %s7, 4
    %s14 = sphi 0, %s26
    %s15 = sphi 0, %s22
    %s16 = sphi 0, %s14
    %s17 = sphi 0, %s15
    %s18 = sphi 0, %s16
    %s19 = sphi 0, %s17
    %s31 = sphi 0, %s33
    %s34 = sphi 0, %s31
    %s35 = sphi 0, %s34
    %s51 = sphi 0, %s35
    %s57 = sphi 0, %s59
    %s60 = sphi 0, %s57
    %s61 = sphi 0, %s60
    %s77 = sphi 0, %s61
  $region4: #{squeeze_excitation.3} parent=0 // loop_header_branch
    %10 = sbr.rel (%p8) target = $region8
  $region5: #{squeeze_excitation.3} parent=0 // loop_body
    %s12 = ssub.s32 %s7, 1
    %s13 = ssub.s32 %s7, 2
    %s20 = sadd.s32 1, %s15
    %p21 = scmp.ge.s32.totalorder %s20, 1
    %s22 = scalar_select %p21, 0, %s20
    %s23 = sadd.s32 1, %s14
    %s24 = scalar_select %p21, %s23, %s14
    %p25 = scmp.ge.s32.totalorder %s24, 2
    %s26 = scalar_select %p25, 0, %s24
    %s27 = ssub.s32 %s14, %s26
    %s28 = ssub.s32 %s15, %s22
    %s29 = sor.u32 %s27, %s28
    %p30 = scmp.eq.s32.totalorder %s29, 0
    %s32 = sadd.s32 %s31, 1
    %s33 = scalar_select %p30, %s31, %s32
    %p36 = pneg %p30
    %p37 = scmp.eq.s32.totalorder %s7, 1
    %p38 = por %p36, %p37
    %p39 = scmp.ne.s32.totalorder %s31, %s34
    %p40 = scmp.eq.s32.totalorder %s7, 0
    %p41 = por %p39, %p40
    %p42 = scmp.ne.s32.totalorder %s31, %s34
    %p43 = scmp.eq.s32.totalorder %s12, 1
    %p44 = por %p42, %p43
    %p45 = scmp.ne.s32.totalorder %s34, %s35
    %p46 = scmp.eq.s32.totalorder %s12, 0
    %p47 = por %p45, %p46
    %p48 = scmp.ne.s32.totalorder %s34, %s35
    %p49 = scmp.eq.s32.totalorder %s13, 1
    %p50 = por %p48, %p49
    %p52 = scmp.ne.s32.totalorder %s35, %s51
    %p53 = scmp.eq.s32.totalorder %s13, 0
    %p54 = por %p52, %p53
    %s55 = ssub.s32 %s14, %s26
    %p56 = scmp.eq.s32.totalorder %s55, 0
    %s58 = sadd.s32 %s57, 1
    %s59 = scalar_select %p56, %s57, %s58
    %p62 = pneg %p56
    %p63 = scmp.eq.s32.totalorder %s7, 1
    %p64 = por %p62, %p63
    %p65 = scmp.ne.s32.totalorder %s57, %s60
    %p66 = scmp.eq.s32.totalorder %s7, 0
    %p67 = por %p65, %p66
    %p68 = scmp.ne.s32.totalorder %s57, %s60
    %p69 = scmp.eq.s32.totalorder %s12, 1
    %p70 = por %p68, %p69
    %p71 = scmp.ne.s32.totalorder %s60, %s61
    %p72 = scmp.eq.s32.totalorder %s12, 0
    %p73 = por %p71, %p72
    %p74 = scmp.ne.s32.totalorder %s60, %s61
    %p75 = scmp.eq.s32.totalorder %s13, 1
    %p76 = por %p74, %p75
    %p78 = scmp.ne.s32.totalorder %s61, %s77
    %p79 = scmp.eq.s32.totalorder %s13, 0
    %p80 = por %p78, %p79
    %p81 = scmp.le.s32.totalorder 1, %s7
    %p82 = scmp.lt.s32.totalorder %s7, 3
    %p83 = pnand %p81, %p82
    %p84 = pneg %p83
    // Predicated region
    $region9: #{squeeze_excitation.3} parent=5 // pred_check
      _
    $region10: #{squeeze_excitation.3} parent=5 // pred_check_branch
      %86 = sbr.rel (%p83) target = $region12
    $region11: #{squeeze_excitation.3} parent=5 // pred_region
      %s87 = ssub.s32 %s7, 1
    $region12: #{squeeze_excitation.3} parent=5 // pred_fallthru
      _
    %p88 = scmp.lt.s32.totalorder %s7, 2
    // Predicated region
    $region13: #{squeeze_excitation.3} parent=5 // pred_check
      %p89 = pneg %p88
    $region14: #{squeeze_excitation.3} parent=5 // pred_check_branch
      %91 = sbr.rel (%p89) target = $region16
    $region15: #{squeeze_excitation.3} parent=5 // pred_region
      // Predicated region
      $region17: #{squeeze_excitation.3} parent=15 // pred_check
        %p92 = pneg %p41
      $region18: #{squeeze_excitation.3} parent=15 // pred_check_branch
        %94 = sbr.rel (%p92) target = $region20
      $region19: #{squeeze_excitation.3} parent=15 // pred_region
        %s95 = smul.u32 2, %s15
        %p96 = scmp.lt.s32.totalorder %s14, 1
        %s97 = scalar_select %p96, %s14, 1
        %p98 = scmp.lt.s32.totalorder %s95, 1
        %s99 = scalar_select %p98, %s95, 1
        %s100 = smul.addr %s97, 8
        %s101 = sadd.s32 %s99, %s100
        %s102 = smul.addr %s101, 8
        %s103 = scalar_lea.vmem %s0, %s102
        %s104 = smul.u32 2, %s15
      $region20: #{squeeze_excitation.3} parent=15 // pred_fallthru
        _
    $region16: #{squeeze_excitation.3} parent=5 // pred_fallthru
      _
    %p105 = scmp.le.s32.totalorder 1, %s7
    %p106 = scmp.lt.s32.totalorder %s7, 3
    %p107 = pnand %p105, %p106
    %p108 = pneg %p107
    // Predicated region
    $region21: #{squeeze_excitation.3} parent=5 // pred_check
      _
    $region22: #{squeeze_excitation.3} parent=5 // pred_check_branch
      %110 = sbr.rel (%p107) target = $region24
    $region23: #{squeeze_excitation.3} parent=5 // pred_region
      %s111 = ssub.s32 %s7, 1
      %s112 = smul.u32 2, %s17
      %p113 = scmp.lt.s32.totalorder %s16, 1
      %s114 = scalar_select %p113, %s16, 1
      %p115 = scmp.lt.s32.totalorder %s112, 1
      %s116 = scalar_select %p115, %s112, 1
      %s117 = smul.addr %s114, 8
      %s118 = sadd.s32 %s116, %s117
      %s119 = smul.addr %s118, 8
      %s120 = scalar_lea.vmem %s0, %s119
      %p121 = pneg %p47
      %p122 = pneg %p44
      %p123 = pneg %p73
      %p124 = pneg %p70
      %p125 = scmp.lt.s32.totalorder %s16, 1
      %s126 = scalar_select %p125, %s16, 1
      %s127 = smul.addr %s126, 4
      %s128 = smul.addr %s127, 8
      %s129 = scalar_lea.vmem %s1, %s128
      %s130 = smul.u32 2, %s17
      %p131 = scmp.lt.s32.totalorder %s16, 1
      %s132 = scalar_select %p131, %s16, 1
      %p133 = scmp.lt.s32.totalorder %s130, 1
      %s134 = scalar_select %p133, %s130, 1
      %s135 = smul.addr %s132, 8
      %s136 = sadd.s32 %s134, %s135
      %s137 = smul.addr %s136, 8
      %s138 = scalar_lea.vmem %s0, %s137
      %s139 = smul.u32 2, %s17
      %p140 = scmp.lt.s32.totalorder %s16, 1
      %s141 = scalar_select %p140, %s16, 1
      %s142 = smul.addr %s141, 4
      %s143 = smul.addr %s142, 8
      %s144 = scalar_lea.vmem %s1, %s143
      %p145 = scmp.eq.s32.totalorder %s17, 0
      // Predicated region
      $region25: #{squeeze_excitation.3} parent=23 // pred_check
        %p146 = pneg %p145
      $region26: #{squeeze_excitation.3} parent=23 // pred_check_branch
        %148 = sbr.rel (%p146) target = $region28
      $region27: #{squeeze_excitation.3} parent=23 // pred_region
        %vm149 = vcmask 7168
        %150 = vst.msk [vmem:[%s144] sm:$0xff] %vm149, 0.0
        %151 = vst.msk [vmem:[%s144 + $0x8] sm:$0xff] %vm149, 0.0
        %152 = vst.msk [vmem:[%s144 + $0x10] sm:$0xff] %vm149, 0.0
        %153 = vst.msk [vmem:[%s144 + $0x18] sm:$0xff] %vm149, 0.0
      $region28: #{squeeze_excitation.3} parent=23 // pred_fallthru
        _
      %v154 = vld [vmem:[%s144] sm:$0xff]
      %v155 = vld [vmem:[%s144 + $0x8] sm:$0xff]
      %v156 = vld [vmem:[%s144 + $0x10] sm:$0xff]
      %v157 = vld [vmem:[%s144 + $0x18] sm:$0xff]
      %v158 = vld [vmem:[%s138] sm:$0xff]
      %v159 = vld [vmem:[%s138 + $0x8] sm:$0xff]
      %v160 = vld [vmem:[%s138 + $0x10] sm:$0xff]
      %v161 = vld [vmem:[%s138 + $0x18] sm:$0xff]
      %v162 = vld [vmem:[%s138 + $0x20] sm:$0xff]
      %v163 = vld [vmem:[%s138 + $0x28] sm:$0xff]
      %v164 = vld [vmem:[%s138 + $0x30] sm:$0xff]
      %v165 = vld [vmem:[%s138 + $0x38] sm:$0xff]
      %v166 = vadd.f32 %v158, %v159
      %167 = vadd.xlane.f32.xlu0 %v166
      %v168 = vpop.xlane.xlu0 %167
      %v169 = vadd.f32 %v160, %v161
      %170 = vadd.xlane.f32.xlu0 %v169
      %v171 = vpop.xlane.xlu0 %170
      %v172 = vadd.f32 %v162, %v163
      %173 = vadd.xlane.f32.xlu0 %v172
      %v174 = vpop.xlane.xlu0 %173
      %v175 = vadd.f32 %v164, %v165
      %176 = vadd.xlane.f32.xlu0 %v175
      %v177 = vpop.xlane.xlu0 %176
      %v178 = vadd.f32 %v154, %v168
      %v179 = vadd.f32 %v155, %v171
      %v180 = vadd.f32 %v156, %v174
      %v181 = vadd.f32 %v157, %v177
      %vm182 = vcmask 7168
      %183 = vst.msk [vmem:[%s144] sm:$0xff] %vm182, %v178
      %184 = vst.msk [vmem:[%s144 + $0x8] sm:$0xff] %vm182, %v179
      %185 = vst.msk [vmem:[%s144 + $0x10] sm:$0xff] %vm182, %v180
      %186 = vst.msk [vmem:[%s144 + $0x18] sm:$0xff] %vm182, %v181
      %p187 = scmp.lt.s32.totalorder %s16, 1
      %s188 = scalar_select %p187, %s16, 1
      %s189 = smul.addr %s188, 4
      %s190 = smul.addr %s189, 8
      %s191 = scalar_lea.vmem %s1, %s190
      // Predicated region
      $region29: #{squeeze_excitation.3} parent=23 // pred_check
        %p192 = pneg %p70
      $region30: #{squeeze_excitation.3} parent=23 // pred_check_branch
        %194 = sbr.rel (%p192) target = $region32
      $region31: #{squeeze_excitation.3} parent=23 // pred_region
        _
      $region32: #{squeeze_excitation.3} parent=23 // pred_fallthru
        _
    $region24: #{squeeze_excitation.3} parent=5 // pred_fallthru
      _
    %p195 = scmp.le.s32.totalorder 2, %s7
    // Predicated region
    $region33: #{squeeze_excitation.3} parent=5 // pred_check
      %p196 = pneg %p195
    $region34: #{squeeze_excitation.3} parent=5 // pred_check_branch
      %198 = sbr.rel (%p196) target = $region36
    $region35: #{squeeze_excitation.3} parent=5 // pred_region
      %s199 = ssub.s32 %s7, 2
      // Predicated region
      $region37: #{squeeze_excitation.3} parent=35 // pred_check
        %p200 = pneg %p76
      $region38: #{squeeze_excitation.3} parent=35 // pred_check_branch
        %202 = sbr.rel (%p200) target = $region40
      $region39: #{squeeze_excitation.3} parent=35 // pred_region
        %p203 = scmp.lt.s32.totalorder %s18, 1
        %s204 = scalar_select %p203, %s18, 1
        %s205 = smul.addr %s204, 4
        %s206 = smul.addr %s205, 8
        %s207 = scalar_lea.vmem %s1, %s206
      $region40: #{squeeze_excitation.3} parent=35 // pred_fallthru
        _
    $region36: #{squeeze_excitation.3} parent=5 // pred_fallthru
      _
  $region6: #{squeeze_excitation.3} parent=0 // loop_footer
    %s11 = sadd.s32 1, %s7
  $region7: #{squeeze_excitation.3} parent=0 // loop_footer_branch
    %6 = sbr.rel target = $region3
  $region8: #{squeeze_excitation.3} parent=0 // loop_exit
    _

// kernel: squeeze_excitation.4
$region0: #{squeeze_excitation.4}
  #allocation0 [shape = 'u32[]', space=smem, size = 0x4, offset = 0x4, fixed_abs, tag = 'smem constant byte address 0x4 - core index']
  #allocation1 [shape = 'u32[72,128]{1,0:T(1,128)}', space=vmem, size = 0x9000, scoped, tag = 'internal scratch']
  %s0 = inlined_call_operand.vmem [shape: f32[8,128], index: 0, kind: input, shape index: {}]
  %s1 = inlined_call_operand.vmem [shape: f32[128,128], index: 1, kind: input, shape index: {}]
  %s2 = inlined_call_operand.vmem [shape: f32[1,128], index: 2, kind: input, shape index: {}]
  %s3 = inlined_call_operand.vmem [shape: f32[128,128], index: 3, kind: input, shape index: {}]
  %s4 = inlined_call_operand.vmem [shape: f32[1,128], index: 4, kind: input, shape index: {}]
  %s5 = inlined_call_operand.vmem [shape: f32[8,128], index: 5, kind: output, shape index: {}]
  %s6 = sld [smem:[#allocation0]]
  $region30: #{squeeze_excitation.4} parent=0
    _
  %s8 = ssub.s32 1, %s6
  %s9 = scalar_select 0, %s8, %s6
  // Predicated region
  $region2: #{squeeze_excitation.4} parent=0 // pred_check
    _
  $region3: #{squeeze_excitation.4} parent=0 // pred_check_branch
    %11 = sbr.rel (0) target = $region5
  $region4: #{squeeze_excitation.4} parent=0 // pred_region
    _
  $region5: #{squeeze_excitation.4} parent=0 // pred_fallthru
    _
  // Predicated region
  $region6: #{squeeze_excitation.4} parent=0 // pred_check
    _
  $region7: #{squeeze_excitation.4} parent=0 // pred_check_branch
    %13 = sbr.rel (0) target = $region9
  $region8: #{squeeze_excitation.4} parent=0 // pred_region
    _
  $region9: #{squeeze_excitation.4} parent=0 // pred_fallthru
    _
  // Predicated region
  $region10: #{squeeze_excitation.4} parent=0 // pred_check
    _
  $region11: #{squeeze_excitation.4} parent=0 // pred_check_branch
    %15 = sbr.rel (0) target = $region13
  $region12: #{squeeze_excitation.4} parent=0 // pred_region
    _
  $region13: #{squeeze_excitation.4} parent=0 // pred_fallthru
    _
  // Predicated region
  $region14: #{squeeze_excitation.4} parent=0 // pred_check
    _
  $region15: #{squeeze_excitation.4} parent=0 // pred_check_branch
    %17 = sbr.rel (0) target = $region17
  $region16: #{squeeze_excitation.4} parent=0 // pred_region
    _
  $region17: #{squeeze_excitation.4} parent=0 // pred_fallthru
    _
  // Predicated region
  $region18: #{squeeze_excitation.4} parent=0 // pred_check
    _
  $region19: #{squeeze_excitation.4} parent=0 // pred_check_branch
    %19 = sbr.rel (0) target = $region21
  $region20: #{squeeze_excitation.4} parent=0 // pred_region
    _
  $region21: #{squeeze_excitation.4} parent=0 // pred_fallthru
    _
  %v20 = vld [vmem:[%s0] sm:$0xff]
  %v21 = vld [vmem:[%s1] sm:$0xff]
  %v22 = vld [vmem:[%s1 + $0x8] sm:$0xff]
  %v23 = vld [vmem:[%s1 + $0x10] sm:$0xff]
  %v24 = vld [vmem:[%s1 + $0x18] sm:$0xff]
  %v25 = vld [vmem:[%s1 + $0x20] sm:$0xff]
  %v26 = vld [vmem:[%s1 + $0x28] sm:$0xff]
  %v27 = vld [vmem:[%s1 + $0x30] sm:$0xff]
  %v28 = vld [vmem:[%s1 + $0x38] sm:$0xff]
  %v29 = vld [vmem:[%s1 + $0x40] sm:$0xff]
  %v30 = vld [vmem:[%s1 + $0x48] sm:$0xff]
  %v31 = vld [vmem:[%s1 + $0x50] sm:$0xff]
  %v32 = vld [vmem:[%s1 + $0x58] sm:$0xff]
  %v33 = vld [vmem:[%s1 + $0x60] sm:$0xff]
  %v34 = vld [vmem:[%s1 + $0x68] sm:$0xff]
  %v35 = vld [vmem:[%s1 + $0x70] sm:$0xff]
  %v36 = vld [vmem:[%s1 + $0x78] sm:$0xff]
  %v37 = vld [vmem:[%s2] sm:$0x1]
  %v39 = vperm.slane %v37, 0
  %41 = vmatpush.msra.mxu0 %v36
  %42 = vmatpush.msra.mxu0 %v35
  %43 = vmatpush.msra.mxu0 %v34
  %44 = vmatpush.msra.mxu0 %v33
  %45 = vmatpush.msra.mxu0 %v32
  %46 = vmatpush.msra.mxu0 %v31
  %47 = vmatpush.msra.mxu0 %v30
  %48 = vmatpush.msra.mxu0 %v29
  %49 = vmatpush.msra.mxu0 %v28
  %50 = vmatpush.msra.mxu0 %v27
  %51 = vmatpush.msra.mxu0 %v26
  %52 = vmatpush.msra.mxu0 %v25
  %53 = vmatpush.msra.mxu0 %v24
  %54 = vmatpush.msra.mxu0 %v23
  %55 = vmatpush.msra.mxu0 %v22
  %56 = vmatpush.msra.mxu0 %v21
  %57 = vmatmul.f32.gmra.mxu0 %v20
  %v58 = vpop.f32.mrf.mxu0
  %v59 = vadd.f32 %v39, %v58
  %60 = vdwg.mxu0
  %v61 = vmax.f32 %v59, 0.0
  %v62 = vld [vmem:[%s3] sm:$0xff]
  %v63 = vld [vmem:[%s3 + $0x8] sm:$0xff]
  %v64 = vld [vmem:[%s3 + $0x10] sm:$0xff]
  %v65 = vld [vmem:[%s3 + $0x18] sm:$0xff]
  %v66 = vld [vmem:[%s3 + $0x20] sm:$0xff]
  %v67 = vld [vmem:[%s3 + $0x28] sm:$0xff]
  %v68 = vld [vmem:[%s3 + $0x30] sm:$0xff]
  %v69 = vld [vmem:[%s3 + $0x38] sm:$0xff]
  %v70 = vld [vmem:[%s3 + $0x40] sm:$0xff]
  %v71 = vld [vmem:[%s3 + $0x48] sm:$0xff]
  %v72 = vld [vmem:[%s3 + $0x50] sm:$0xff]
  %v73 = vld [vmem:[%s3 + $0x58] sm:$0xff]
  %v74 = vld [vmem:[%s3 + $0x60] sm:$0xff]
  %v75 = vld [vmem:[%s3 + $0x68] sm:$0xff]
  %v76 = vld [vmem:[%s3 + $0x70] sm:$0xff]
  %v77 = vld [vmem:[%s3 + $0x78] sm:$0xff]
  %v78 = vld [vmem:[%s4] sm:$0x1]
  %v80 = vperm.slane %v78, 0
  %82 = vmatpush.msra.mxu0 %v77
  %83 = vmatpush.msra.mxu0 %v76
  %84 = vmatpush.msra.mxu0 %v75
  %85 = vmatpush.msra.mxu0 %v74
  %86 = vmatpush.msra.mxu0 %v73
  %87 = vmatpush.msra.mxu0 %v72
  %88 = vmatpush.msra.mxu0 %v71
  %89 = vmatpush.msra.mxu0 %v70
  %90 = vmatpush.msra.mxu0 %v69
  %91 = vmatpush.msra.mxu0 %v68
  %92 = vmatpush.msra.mxu0 %v67
  %93 = vmatpush.msra.mxu0 %v66
  %94 = vmatpush.msra.mxu0 %v65
  %95 = vmatpush.msra.mxu0 %v64
  %96 = vmatpush.msra.mxu0 %v63
  %97 = vmatpush.msra.mxu0 %v62
  %98 = vmatmul.f32.gmra.mxu0 %v61
  %v99 = vpop.f32.mrf.mxu0
  %v100 = vadd.f32 %v80, %v99
  %101 = vdwg.mxu0
  %v102 = vxor.u32 %v100, 2147483648
  %v103 = vmul.f32 %v102, 1.442695
  %v104 = vpow.pop %v103
  %v105 = vadd.f32 %v104, 1.0
  %v106 = vrcp.pop %v105
  %v107 = vmul.f32 %v105, %v106
  %v108 = vsub.f32 1.0, %v107
  %v109 = vmul.f32 %v106, %v108
  %v110 = vadd.f32 %v106, %v109
  %vm111 = vweird.f32 %v105
  %vm112 = vweird.f32 %v106
  %vm113 = vmor %vm111, %vm112
  %v114 = vsel %vm113, %v106, %v110
  %v115 = vand.u32 2147483647, %v105
  %vm116 = vcmp.eq.f32.partialorder %v115, 8.507059e+37
  %v117 = vand.u32 %v105, 2147483648
  %v118 = vor.u32 1.1754944e-38, %v117
  %v119 = vsel %vm116, %v118, %v114
  %v120 = vmul.f32 1.0, %v119
  %121 = vst [vmem:[%s5] sm:$0xff] %v120
  // Predicated region
  $region22: #{squeeze_excitation.4} parent=0 // pred_check
    _
  $region23: #{squeeze_excitation.4} parent=0 // pred_check_branch
    %123 = sbr.rel (0) target = $region25
  $region24: #{squeeze_excitation.4} parent=0 // pred_region
    _
  $region25: #{squeeze_excitation.4} parent=0 // pred_fallthru
    _
  // Predicated region
  $region26: #{squeeze_excitation.4} parent=0 // pred_check
    _
  $region27: #{squeeze_excitation.4} parent=0 // pred_check_branch
    %125 = sbr.rel (0) target = $region29
  $region28: #{squeeze_excitation.4} parent=0 // pred_region
    _
  $region29: #{squeeze_excitation.4} parent=0 // pred_fallthru
    _

// kernel: squeeze_excitation.5
$region0: #{squeeze_excitation.5}
  #allocation0 [shape = 'u32[]', space=smem, size = 0x4, offset = 0x4, fixed_abs, tag = 'smem constant byte address 0x4 - core index']
  #allocation1 [shape = 'u32[72,128]{1,0:T(1,128)}', space=vmem, size = 0x9000, scoped, tag = 'internal scratch']
  %s0 = inlined_call_operand.vmem [shape: f32[2,32,256], index: 0, kind: input, shape index: {}]
  %s1 = inlined_call_operand.vmem [shape: f32[2,32,1], index: 1, kind: input, shape index: {}]
  %s2 = inlined_call_operand.vmem [shape: f32[2,32,256], index: 2, kind: output, shape index: {}]
  %s3 = sld [smem:[#allocation0]]
  $region41: #{squeeze_excitation.5} parent=0
    _
  %s5 = ssub.s32 1, %s3
  %s6 = scalar_select 0, %s5, %s3
  loop: start=0, step=1, limit=4
  $region2: #{squeeze_excitation.5} parent=0 // loop_pre_header
    _
  $region3: #{squeeze_excitation.5} parent=0 // loop_header
    %s8 = sphi 0, %s12
    %p9 = scmp.ge.s32.totalorder %s8, 4
    %s15 = sphi 0, %s27
    %s16 = sphi 0, %s23
    %s17 = sphi 0, %s15
    %s18 = sphi 0, %s16
    %s19 = sphi 0, %s17
    %s20 = sphi 0, %s18
    %s32 = sphi 0, %s34
    %s35 = sphi 0, %s32
    %s36 = sphi 0, %s35
    %s52 = sphi 0, %s36
    %s58 = sphi 0, %s60
    %s61 = sphi 0, %s58
    %s62 = sphi 0, %s61
    %s78 = sphi 0, %s62
    %s86 = sphi 0, %s88
    %s89 = sphi 0, %s86
    %s90 = sphi 0, %s89
    %s106 = sphi 0, %s90
  $region4: #{squeeze_excitation.5} parent=0 // loop_header_branch
    %11 = sbr.rel (%p9) target = $region8
  $region5: #{squeeze_excitation.5} parent=0 // loop_body
    %s13 = ssub.s32 %s8, 1
    %s14 = ssub.s32 %s8, 2
    %s21 = sadd.s32 1, %s16
    %p22 = scmp.ge.s32.totalorder %s21, 1
    %s23 = scalar_select %p22, 0, %s21
    %s24 = sadd.s32 1, %s15
    %s25 = scalar_select %p22, %s24, %s15
    %p26 = scmp.ge.s32.totalorder %s25, 2
    %s27 = scalar_select %p26, 0, %s25
    %s28 = ssub.s32 %s15, %s27
    %s29 = ssub.s32 %s16, %s23
    %s30 = sor.u32 %s28, %s29
    %p31 = scmp.eq.s32.totalorder %s30, 0
    %s33 = sadd.s32 %s32, 1
    %s34 = scalar_select %p31, %s32, %s33
    %p37 = pneg %p31
    %p38 = scmp.eq.s32.totalorder %s8, 1
    %p39 = por %p37, %p38
    %p40 = scmp.ne.s32.totalorder %s32, %s35
    %p41 = scmp.eq.s32.totalorder %s8, 0
    %p42 = por %p40, %p41
    %p43 = scmp.ne.s32.totalorder %s32, %s35
    %p44 = scmp.eq.s32.totalorder %s13, 1
    %p45 = por %p43, %p44
    %p46 = scmp.ne.s32.totalorder %s35, %s36
    %p47 = scmp.eq.s32.totalorder %s13, 0
    %p48 = por %p46, %p47
    %p49 = scmp.ne.s32.totalorder %s35, %s36
    %p50 = scmp.eq.s32.totalorder %s14, 1
    %p51 = por %p49, %p50
    %p53 = scmp.ne.s32.totalorder %s36, %s52
    %p54 = scmp.eq.s32.totalorder %s14, 0
    %p55 = por %p53, %p54
    %s56 = ssub.s32 %s15, %s27
    %p57 = scmp.eq.s32.totalorder %s56, 0
    %s59 = sadd.s32 %s58, 1
    %s60 = scalar_select %p57, %s58, %s59
    %p63 = pneg %p57
    %p64 = scmp.eq.s32.totalorder %s8, 1
    %p65 = por %p63, %p64
    %p66 = scmp.ne.s32.totalorder %s58, %s61
    %p67 = scmp.eq.s32.totalorder %s8, 0
    %p68 = por %p66, %p67
    %p69 = scmp.ne.s32.totalorder %s58, %s61
    %p70 = scmp.eq.s32.totalorder %s13, 1
    %p71 = por %p69, %p70
    %p72 = scmp.ne.s32.totalorder %s61, %s62
    %p73 = scmp.eq.s32.totalorder %s13, 0
    %p74 = por %p72, %p73
    %p75 = scmp.ne.s32.totalorder %s61, %s62
    %p76 = scmp.eq.s32.totalorder %s14, 1
    %p77 = por %p75, %p76
    %p79 = scmp.ne.s32.totalorder %s62, %s78
    %p80 = scmp.eq.s32.totalorder %s14, 0
    %p81 = por %p79, %p80
    %s82 = ssub.s32 %s15, %s27
    %s83 = ssub.s32 %s16, %s23
    %s84 = sor.u32 %s82, %s83
    %p85 = scmp.eq.s32.totalorder %s84, 0
    %s87 = sadd.s32 %s86, 1
    %s88 = scalar_select %p85, %s86, %s87
    %p91 = pneg %p85
    %p92 = scmp.eq.s32.totalorder %s8, 1
    %p93 = por %p91, %p92
    %p94 = scmp.ne.s32.totalorder %s86, %s89
    %p95 = scmp.eq.s32.totalorder %s8, 0
    %p96 = por %p94, %p95
    %p97 = scmp.ne.s32.totalorder %s86, %s89
    %p98 = scmp.eq.s32.totalorder %s13, 1
    %p99 = por %p97, %p98
    %p100 = scmp.ne.s32.totalorder %s89, %s90
    %p101 = scmp.eq.s32.totalorder %s13, 0
    %p102 = por %p100, %p101
    %p103 = scmp.ne.s32.totalorder %s89, %s90
    %p104 = scmp.eq.s32.totalorder %s14, 1
    %p105 = por %p103, %p104
    %p107 = scmp.ne.s32.totalorder %s90, %s106
    %p108 = scmp.eq.s32.totalorder %s14, 0
    %p109 = por %p107, %p108
    %p110 = scmp.le.s32.totalorder 1, %s8
    %p111 = scmp.lt.s32.totalorder %s8, 3
    %p112 = pnand %p110, %p111
    %p113 = pneg %p112
    // Predicated region
    $region9: #{squeeze_excitation.5} parent=5 // pred_check
      _
    $region10: #{squeeze_excitation.5} parent=5 // pred_check_branch
      %115 = sbr.rel (%p112) target = $region12
    $region11: #{squeeze_excitation.5} parent=5 // pred_region
      %s116 = ssub.s32 %s8, 1
    $region12: #{squeeze_excitation.5} parent=5 // pred_fallthru
      _
    %p117 = scmp.lt.s32.totalorder %s8, 2
    // Predicated region
    $region13: #{squeeze_excitation.5} parent=5 // pred_check
      %p118 = pneg %p117
    $region14: #{squeeze_excitation.5} parent=5 // pred_check_branch
      %120 = sbr.rel (%p118) target = $region16
    $region15: #{squeeze_excitation.5} parent=5 // pred_region
      // Predicated region
      $region17: #{squeeze_excitation.5} parent=15 // pred_check
        %p121 = pneg %p42
      $region18: #{squeeze_excitation.5} parent=15 // pred_check_branch
        %123 = sbr.rel (%p121) target = $region20
      $region19: #{squeeze_excitation.5} parent=15 // pred_region
        %s124 = smul.u32 2, %s16
        %p125 = scmp.lt.s32.totalorder %s15, 1
        %s126 = scalar_select %p125, %s15, 1
        %p127 = scmp.lt.s32.totalorder %s124, 1
        %s128 = scalar_select %p127, %s124, 1
        %s129 = smul.addr %s126, 8
        %s130 = sadd.s32 %s128, %s129
        %s131 = smul.addr %s130, 8
        %s132 = scalar_lea.vmem %s0, %s131
        %s133 = smul.u32 2, %s16
      $region20: #{squeeze_excitation.5} parent=15 // pred_fallthru
        _
      // Predicated region
      $region21: #{squeeze_excitation.5} parent=15 // pred_check
        %p134 = pneg %p68
      $region22: #{squeeze_excitation.5} parent=15 // pred_check_branch
        %136 = sbr.rel (%p134) target = $region24
      $region23: #{squeeze_excitation.5} parent=15 // pred_region
        %p137 = scmp.lt.s32.totalorder %s15, 1
        %s138 = scalar_select %p137, %s15, 1
        %s139 = smul.addr %s138, 4
        %s140 = smul.addr %s139, 8
        %s141 = scalar_lea.vmem %s1, %s140
      $region24: #{squeeze_excitation.5} parent=15 // pred_fallthru
        _
    $region16: #{squeeze_excitation.5} parent=5 // pred_fallthru
      _
    %p142 = scmp.le.s32.totalorder 1, %s8
    %p143 = scmp.lt.s32.totalorder %s8, 3
    %p144 = pnand %p142, %p143
    %p145 = pneg %p144
    // Predicated region
    $region25: #{squeeze_excitation.5} parent=5 // pred_check
      _
    $region26: #{squeeze_excitation.5} parent=5 // pred_check_branch
      %147 = sbr.rel (%p144) target = $region28
    $region27: #{squeeze_excitation.5} parent=5 // pred_region
      %s148 = ssub.s32 %s8, 1
      %s149 = smul.u32 2, %s18
      %p150 = scmp.lt.s32.totalorder %s17, 1
      %s151 = scalar_select %p150, %s17, 1
      %p152 = scmp.lt.s32.totalorder %s149, 1
      %s153 = scalar_select %p152, %s149, 1
      %s154 = smul.addr %s151, 8
      %s155 = sadd.s32 %s153, %s154
      %s156 = smul.addr %s155, 8
      %s157 = scalar_lea.vmem %s0, %s156
      %p158 = pneg %p48
      %p159 = pneg %p45
      %p160 = scmp.lt.s32.totalorder %s17, 1
      %s161 = scalar_select %p160, %s17, 1
      %s162 = smul.addr %s161, 4
      %s163 = smul.addr %s162, 8
      %s164 = scalar_lea.vmem %s1, %s163
      %p165 = pneg %p74
      %p166 = pneg %p71
      %p167 = pneg %p102
      %p168 = pneg %p99
      %s169 = smul.u32 2, %s18
      %p170 = scmp.lt.s32.totalorder %s17, 1
      %s171 = scalar_select %p170, %s17, 1
      %p172 = scmp.lt.s32.totalorder %s169, 1
      %s173 = scalar_select %p172, %s169, 1
      %s174 = smul.addr %s171, 8
      %s175 = sadd.s32 %s173, %s174
      %s176 = smul.addr %s175, 8
      %s177 = scalar_lea.vmem %s2, %s176
      %s178 = smul.u32 2, %s18
      %p179 = scmp.lt.s32.totalorder %s17, 1
      %s180 = scalar_select %p179, %s17, 1
      %p181 = scmp.lt.s32.totalorder %s178, 1
      %s182 = scalar_select %p181, %s178, 1
      %s183 = smul.addr %s180, 8
      %s184 = sadd.s32 %s182, %s183
      %s185 = smul.addr %s184, 8
      %s186 = scalar_lea.vmem %s0, %s185
      %s187 = smul.u32 2, %s18
      %p188 = scmp.lt.s32.totalorder %s17, 1
      %s189 = scalar_select %p188, %s17, 1
      %s190 = smul.addr %s189, 4
      %s191 = smul.addr %s190, 8
      %s192 = scalar_lea.vmem %s1, %s191
      %s193 = smul.u32 2, %s18
      %p194 = scmp.lt.s32.totalorder %s17, 1
      %s195 = scalar_select %p194, %s17, 1
      %p196 = scmp.lt.s32.totalorder %s193, 1
      %s197 = scalar_select %p196, %s193, 1
      %s198 = smul.addr %s195, 8
      %s199 = sadd.s32 %s197, %s198
      %s200 = smul.addr %s199, 8
      %s201 = scalar_lea.vmem %s2, %s200
      %s202 = smul.u32 2, %s18
      %v203 = vld [vmem:[%s186] sm:$0xff]
      %v204 = vld [vmem:[%s186 + $0x8] sm:$0xff]
      %v205 = vld [vmem:[%s186 + $0x10] sm:$0xff]
      %v206 = vld [vmem:[%s186 + $0x18] sm:$0xff]
      %v207 = vld [vmem:[%s186 + $0x20] sm:$0xff]
      %v208 = vld [vmem:[%s186 + $0x28] sm:$0xff]
      %v209 = vld [vmem:[%s186 + $0x30] sm:$0xff]
      %v210 = vld [vmem:[%s186 + $0x38] sm:$0xff]
      %v211 = vld [vmem:[%s192] sm:$0xff]
      %v212 = vld [vmem:[%s192 + $0x8] sm:$0xff]
      %v213 = vld [vmem:[%s192 + $0x10] sm:$0xff]
      %v214 = vld [vmem:[%s192 + $0x18] sm:$0xff]
      %216 = vset.pattern.permute.xlu0 0
      %217 = vperm.xlu0 %216, %v211
      %v218 = vpop.permute.xlu0 %217
      %221 = vset.pattern.permute.xlu0 0
      %222 = vperm.xlu0 %221, %v212
      %v223 = vpop.permute.xlu0 %222
      %226 = vset.pattern.permute.xlu0 0
      %227 = vperm.xlu0 %226, %v213
      %v228 = vpop.permute.xlu0 %227
      %231 = vset.pattern.permute.xlu0 0
      %232 = vperm.xlu0 %231, %v214
      %v233 = vpop.permute.xlu0 %232
      %v235 = vmul.f32 %v203, %v218
      %v236 = vmul.f32 %v204, %v218
      %v237 = vmul.f32 %v205, %v223
      %v238 = vmul.f32 %v206, %v223
      %v239 = vmul.f32 %v207, %v228
      %v240 = vmul.f32 %v208, %v228
      %v241 = vmul.f32 %v209, %v233
      %v242 = vmul.f32 %v210, %v233
      %243 = vst [vmem:[%s201] sm:$0xff] %v235
      %244 = vst [vmem:[%s201 + $0x8] sm:$0xff] %v236
      %245 = vst [vmem:[%s201 + $0x10] sm:$0xff] %v237
      %246 = vst [vmem:[%s201 + $0x18] sm:$0xff] %v238
      %247 = vst [vmem:[%s201 + $0x20] sm:$0xff] %v239
      %248 = vst [vmem:[%s201 + $0x28] sm:$0xff] %v240
      %249 = vst [vmem:[%s201 + $0x30] sm:$0xff] %v241
      %250 = vst [vmem:[%s201 + $0x38] sm:$0xff] %v242
      %s251 = smul.u32 2, %s18
      %p252 = scmp.lt.s32.totalorder %s17, 1
      %s253 = scalar_select %p252, %s17, 1
      %p254 = scmp.lt.s32.totalorder %s251, 1
      %s255 = scalar_select %p254, %s251, 1
      %s256 = smul.addr %s253, 8
      %s257 = sadd.s32 %s255, %s256
      %s258 = smul.addr %s257, 8
      %s259 = scalar_lea.vmem %s2, %s258
      // Predicated region
      $region29: #{squeeze_excitation.5} parent=27 // pred_check
        %p260 = pneg %p99
      $region30: #{squeeze_excitation.5} parent=27 // pred_check_branch
        %262 = sbr.rel (%p260) target = $region32
      $region31: #{squeeze_excitation.5} parent=27 // pred_region
        %s263 = smul.u32 2, %s18
      $region32: #{squeeze_excitation.5} parent=27 // pred_fallthru
        _
    $region28: #{squeeze_excitation.5} parent=5 // pred_fallthru
      _
    %p264 = scmp.le.s32.totalorder 2, %s8
    // Predicated region
    $region33: #{squeeze_excitation.5} parent=5 // pred_check
      %p265 = pneg %p264
    $region34: #{squeeze_excitation.5} parent=5 // pred_check_branch
      %267 = sbr.rel (%p265) target = $region36
    $region35: #{squeeze_excitation.5} parent=5 // pred_region
      %s268 = ssub.s32 %s8, 2
      // Predicated region
      $region37: #{squeeze_excitation.5} parent=35 // pred_check
        %p269 = pneg %p105
      $region38: #{squeeze_excitation.5} parent=35 // pred_check_branch
        %271 = sbr.rel (%p269) target = $region40
      $region39: #{squeeze_excitation.5} parent=35 // pred_region
        %s272 = smul.u32 2, %s20
        %p273 = scmp.lt.s32.totalorder %s19, 1
        %s274 = scalar_select %p273, %s19, 1
        %p275 = scmp.lt.s32.totalorder %s272, 1
        %s276 = scalar_select %p275, %s272, 1
        %s277 = smul.addr %s274, 8
        %s278 = sadd.s32 %s276, %s277
        %s279 = smul.addr %s278, 8
        %s280 = scalar_lea.vmem %s2, %s279
      $region40: #{squeeze_excitation.5} parent=35 // pred_fallthru
        _
    $region36: #{squeeze_excitation.5} parent=5 // pred_fallthru
      _
  $region6: #{squeeze_excitation.5} parent=0 // loop_footer
    %s12 = sadd.s32 1, %s8
  $region7: #{squeeze_excitation.5} parent=0 // loop_footer_branch
    %7 = sbr.rel target = $region3
  $region8: #{squeeze_excitation.5} parent=0 // loop_exit
    _

</llo_original>
